<compile_context>
chip_gen: v6e
topology: v6e:2x2x1
jax: 0.10.0
libtpu: 0.0.40
codegen_flags: <defaults>
</compile_context>

<pallas_src>
import jax
import jax.numpy as jnp
from jax.experimental import pallas as pl
from jax.experimental.pallas import tpu as pltpu


# ---------------------------------------------------------------------------
# Pallas kernel: fused 1x1 conv   out[cmax, T] = W[cmax, cin] @ x[cin, T] + b
# One (batch, HW-tile) per grid step.  Output last dim is the spatial tile
# (always a multiple of 128) -> lane-dense, unmasked stores.
# ---------------------------------------------------------------------------
def _mixed_width_kernel(x_ref, w_ref, b_ref, o_ref):
    # x_ref: (1, Cin, T) f32 ; w_ref: (Cmax, Cin) bf16 ; b_ref: (Cmax, 1) f32
    # o_ref: (1, Cmax, T) bf16 (or f32 if exact-parity storage was requested)
    x_bf = x_ref[0].astype(jnp.bfloat16)            # in-kernel cast: VPU, hidden
    acc = jnp.dot(w_ref[...], x_bf,
                  preferred_element_type=jnp.float32)   # MXU, f32 accumulate
    o_ref[0] = (acc + b_ref[...]).astype(o_ref.dtype)   # bias in f32, cast at store


# ---------------------------------------------------------------------------
# Tiling helpers.
# ---------------------------------------------------------------------------
def _tile_vmem_budget():
    """VMEM byte budget for the double-buffered x + out tiles, generation-aware."""
    try:
        cap = pltpu.get_tpu_info().vmem_capacity_bytes
    except Exception:
        cap = 64 << 20
    # v7x: 64 MiB physical / 32 MiB scoped default -> stay small.
    # v5e/v6e: 128 MiB physical -> allow bigger tiles (limit raised explicitly).
    return (12 << 20) if cap <= (64 << 20) else (24 << 20)


def _pick_hw_tile(hw_pad, cin, cmax, n_batch, x_bytes, out_bytes, budget):
    """Largest T (multiple of 128 dividing hw_pad) whose double-buffered x (f32)
    and out tiles fit `budget`; keeps >= 2 grid steps when N == 1 (megacore)."""
    m = hw_pad // 128
    per_128_lanes = 2 * 128 * (cin * x_bytes + cmax * out_bytes)  # dbl-buffered
    d_budget = max(1, budget // per_128_lanes)
    d_cap = m
    if n_batch == 1 and m >= 2:
        d_cap = max(1, m // 2)          # split HW so both TCs get work
    d_max = max(1, min(d_budget, d_cap))
    best, d = 1, 1
    while d * d <= m:                   # largest divisor of m that is <= d_max
        if m % d == 0:
            if d <= d_max:
                best = max(best, d)
            if (m // d) <= d_max:
                best = max(best, m // d)
        d += 1
    return 128 * best


def mixed_channel_width_pallas(x_nchw, w_fused, b_fused, out_dtype=jnp.bfloat16):
    """x_nchw: [N, Cin, H, W] f32; w_fused: [Cmax, Cin]; b_fused: [Cmax].
    Returns [N, Cmax, H, W] in `out_dtype` (bf16 by default for HBM bandwidth)."""
    N, Cin, H, W = x_nchw.shape
    Cmax = w_fused.shape[0]
    HW = H * W
    HWp = ((HW + 127) // 128) * 128                 # lane-dense padded spatial dim

    x_bytes = jnp.dtype(x_nchw.dtype).itemsize
    out_bytes = jnp.dtype(out_dtype).itemsize
    budget = _tile_vmem_budget()
    T = _pick_hw_tile(HWp, Cin, Cmax, N, x_bytes, out_bytes, budget)

    x = x_nchw.reshape(N, Cin, HW)                  # NCHW contiguous: free reshape
    if HWp != HW:
        x = jnp.pad(x, ((0, 0), (0, 0), (0, HWp - HW)))
    w = w_fused.astype(jnp.bfloat16)
    b = b_fused.reshape(Cmax, 1).astype(jnp.float32)

    # Per-step VMEM: double-buffered x/out tiles + single-buffered w/b.
    need = 2 * T * (Cin * x_bytes + Cmax * out_bytes) + Cmax * Cin * 2 + Cmax * 4
    vmem_limit = int(max(32 << 20, need + (8 << 20)))

    out = pl.pallas_call(
        _mixed_width_kernel,
        out_shape=jax.ShapeDtypeStruct((N, Cmax, HWp), out_dtype),
        grid=(N, HWp // T),
        in_specs=[
            pl.BlockSpec((1, Cin, T), lambda n, t: (n, 0, t)),
            # Constant block index across the grid -> single buffer saves VMEM.
            pl.BlockSpec((Cmax, Cin), lambda n, t: (0, 0),
                         pipeline_mode=pl.Buffered(1)),
            pl.BlockSpec((Cmax, 1), lambda n, t: (0, 0),
                         pipeline_mode=pl.Buffered(1)),
        ],
        out_specs=pl.BlockSpec((1, Cmax, T), lambda n, t: (n, 0, t)),
        compiler_params=pltpu.CompilerParams(
            dimension_semantics=("parallel", "parallel"),
            vmem_limit_bytes=vmem_limit),
    )(x, w, b)

    if HWp != HW:
        out = out[..., :HW]
    return out.reshape(N, Cmax, H, W)


# ---------------------------------------------------------------------------
# Parameter init (mirrors PyTorch Conv2d default init) and forward pass.
# ---------------------------------------------------------------------------
WIDTH_OPTIONS = [0.5, 0.75, 1.0, 1.25, 1.5]


def init_params(key, in_channels, base_channels, width_options=WIDTH_OPTIONS):
    n_ops = len(width_options)
    keys = jax.random.split(key, 2 * n_ops + 1)
    k = 1.0 / (in_channels ** 0.5)                  # kernel_size=1 -> fan_in = Cin
    params = {'alpha': jax.random.normal(keys[0], (n_ops,), jnp.float32),
              'W': [], 'b': []}
    for i, wm in enumerate(width_options):
        oc = int(base_channels * wm)
        params['W'].append(
            jax.random.uniform(keys[1 + 2 * i], (oc, in_channels), jnp.float32, -k, k))
        params['b'].append(
            jax.random.uniform(keys[2 + 2 * i], (oc,), jnp.float32, -k, k))
    return params


def mixed_channel_width_forward(x_nchw, params, out_dtype=jnp.bfloat16):
    """Fold softmax(alpha), all per-width 1x1 convs and the channel zero-padding
    into a single (Cmax, Cin) weight / (Cmax,) bias, then run one Pallas matmul."""
    a = jax.nn.softmax(params['alpha'])
    cin = x_nchw.shape[1]
    cmax = max(int(Wi.shape[0]) for Wi in params['W'])

    w_fused = jnp.zeros((cmax, cin), jnp.float32)
    b_fused = jnp.zeros((cmax,), jnp.float32)
    for i, (Wi, bi) in enumerate(zip(params['W'], params['b'])):
        oc = Wi.shape[0]
        w_fused = w_fused.at[:oc].add(a[i] * Wi)
        b_fused = b_fused.at[:oc].add(a[i] * bi)

    return mixed_channel_width_pallas(x_nchw, w_fused, b_fused, out_dtype=out_dtype)


# ---------------------------------------------------------------------------
# Pure-JAX reference mirroring the PyTorch loop (per-path conv, pad, scale, sum)
# in full float32 precision, for validating the fused Pallas path.
# ---------------------------------------------------------------------------
def reference_forward(x_nchw, params):
    a = jax.nn.softmax(params['alpha'])
    N, Cin, H, W = x_nchw.shape
    cmax = max(int(Wi.shape[0]) for Wi in params['W'])
    out = jnp.zeros((N, cmax, H, W), jnp.float32)
    for i, (Wi, bi) in enumerate(zip(params['W'], params['b'])):
        oc = Wi.shape[0]
        y = jnp.einsum('oc,nchw->nohw', Wi, x_nchw) + bi[None, :, None, None]
        y = jnp.pad(y, ((0, 0), (0, cmax - oc), (0, 0), (0, 0)))
        out = out + a[i] * y
    return out


if __name__ == "__main__":
    key = jax.random.PRNGKey(0)
    kx, kp, kx2 = jax.random.split(key, 3)

    # --- main test: lane-aligned spatial dims -------------------------------
    N, Cin, H, W = 2, 4, 16, 16
    base_channels = Cin                              # as in the PyTorch module usage
    cmax = int(base_channels * max(WIDTH_OPTIONS))   # = 6

    x = jax.random.normal(kx, (N, Cin, H, W), jnp.float32)
    params = init_params(kp, Cin, base_channels)

    fwd = jax.jit(mixed_channel_width_forward)
    out = jax.block_until_ready(fwd(x, params))
    assert out.shape == (N, cmax, H, W), out.shape

    ref = jax.block_until_ready(reference_forward(x, params))
    out_f32 = out.astype(jnp.float32)
    max_err = float(jnp.max(jnp.abs(out_f32 - ref)))
    # bf16 operands / bf16 output, f32 accumulate vs f32 reference.
    assert jnp.allclose(out_f32, ref, atol=3e-2, rtol=3e-2), f"max_err={max_err}"

    # --- second test: HW not a multiple of 128 exercises the padding path ---
    x2 = jax.random.normal(kx2, (1, Cin, 10, 10), jnp.float32)
    out2 = jax.block_until_ready(fwd(x2, params))
    ref2 = jax.block_until_ready(reference_forward(x2, params))
    assert out2.shape == (1, cmax, 10, 10), out2.shape
    max_err2 = float(jnp.max(jnp.abs(out2.astype(jnp.float32) - ref2)))
    assert jnp.allclose(out2.astype(jnp.float32), ref2, atol=3e-2, rtol=3e-2), \
        f"max_err2={max_err2}"

    print("KERNEL_OK")
</pallas_src>

<mosaic_0001>
module attributes {stable_mosaic.version = 11 : i64} {
  func.func @_mixed_width_kernel(%arg0: i32, %arg1: i32, %arg2: memref<1x4x256xf32, #tpu.memory_space<vmem>>, %arg3: memref<6x4xbf16, #tpu.memory_space<vmem>>, %arg4: memref<6x1xf32, #tpu.memory_space<vmem>>, %arg5: memref<1x6x256xbf16, #tpu.memory_space<vmem>>) attributes {dimension_semantics = [#tpu.dimension_semantics<parallel>, #tpu.dimension_semantics<parallel>], iteration_bounds = array<i64: 2, 1>, scalar_prefetch = 0 : i64, scratch_operands = 0 : i64, tpu.core_type = #tpu.core_type<tc>, window_params = [{transform_indices = @transform_0, window_bounds = array<i64: 1, 4, 256>}, {pipeline_mode = #tpu.pipeline_mode<synchronous>, transform_indices = @transform_1, window_bounds = array<i64: 6, 4>}, {pipeline_mode = #tpu.pipeline_mode<synchronous>, transform_indices = @transform_2, window_bounds = array<i64: 6, 1>}, {transform_indices = @transform_3, window_bounds = array<i64: 1, 6, 256>}]} {
    %c0 = arith.constant 0 : index
    %c0_0 = arith.constant 0 : index
    %c0_1 = arith.constant 0 : index
    %0 = vector.load %arg2[%c0, %c0_0, %c0_1] : memref<1x4x256xf32, #tpu.memory_space<vmem>>, vector<1x4x256xf32>
    %1 = vector.shape_cast %0 : vector<1x4x256xf32> to vector<4x256xf32>
    %2 = arith.truncf %1 : vector<4x256xf32> to vector<4x256xbf16>
    %c0_2 = arith.constant 0 : index
    %c0_3 = arith.constant 0 : index
    %3 = vector.load %arg3[%c0_2, %c0_3] : memref<6x4xbf16, #tpu.memory_space<vmem>>, vector<6x4xbf16>
    %cst = arith.constant dense<0.000000e+00> : vector<6x256xf32>
    %4 = tpu.matmul %3, %2, %cst {dimension_numbers = #tpu.dot_dimension_numbers<[1], [0], [0], [1], [0, 0, 1, 1], [], []>} : vector<6x4xbf16>, vector<4x256xbf16>, vector<6x256xf32> -> vector<6x256xf32>
    %c0_4 = arith.constant 0 : index
    %c0_5 = arith.constant 0 : index
    %5 = vector.load %arg4[%c0_4, %c0_5] : memref<6x1xf32, #tpu.memory_space<vmem>>, vector<6x1xf32>
    %6 = vector.broadcast %5 : vector<6x1xf32> to vector<6x256xf32>
    %7 = arith.addf %4, %6 : vector<6x256xf32>
    %8 = arith.truncf %7 : vector<6x256xf32> to vector<6x256xbf16>
    %c0_6 = arith.constant 0 : index
    %c0_7 = arith.constant 0 : index
    %c0_8 = arith.constant 0 : index
    %9 = vector.load %arg5[%c0_6, %c0_7, %c0_8] : memref<1x6x256xbf16, #tpu.memory_space<vmem>>, vector<1x6x256xbf16>
    %10 = vector.shape_cast %9 : vector<1x6x256xbf16> to vector<6x256xbf16>
    %11 = vector.shape_cast %8 : vector<6x256xbf16> to vector<1x6x256xbf16>
    tpu.vector_store %arg5[%c0_6, %c0_7, %c0_8], %11 {strides = array<i32>} : memref<1x6x256xbf16, #tpu.memory_space<vmem>>, vector<1x6x256xbf16>,
    return
  }
  func.func @transform_0(%arg0: i32, %arg1: i32) -> (i32, i32, i32) {
    %c0_i32 = arith.constant 0 : i32
    %c0_i32_0 = arith.constant 0 : i32
    return %arg0, %c0_i32, %arg1 : i32, i32, i32
  }
  func.func @transform_1(%arg0: i32, %arg1: i32) -> (i32, i32) {
    %c0_i32 = arith.constant 0 : i32
    %c0_i32_0 = arith.constant 0 : i32
    %c0_i32_1 = arith.constant 0 : i32
    return %c0_i32, %c0_i32_0 : i32, i32
  }
  func.func @transform_2(%arg0: i32, %arg1: i32) -> (i32, i32) {
    %c0_i32 = arith.constant 0 : i32
    %c0_i32_0 = arith.constant 0 : i32
    %c0_i32_1 = arith.constant 0 : i32
    return %c0_i32, %c0_i32_0 : i32, i32
  }
  func.func @transform_3(%arg0: i32, %arg1: i32) -> (i32, i32, i32) {
    %c0_i32 = arith.constant 0 : i32
    %c0_i32_0 = arith.constant 0 : i32
    return %arg0, %c0_i32, %arg1 : i32, i32, i32
  }
}

</mosaic_0001>

<llo_original>
// kernel: mixed_channel_width_forward.1
$region0: #{mixed_channel_width_forward.1}
  #allocation0 [shape = 'u32[]', space=smem, size = 0x4, offset = 0x4, fixed_abs, tag = 'smem constant byte address 0x4 - core index']
  #allocation1 [shape = 'u32[144,128]{1,0:T(1,128)}', space=vmem, size = 0x12000, scoped, tag = 'internal scratch']
  %s0 = inlined_call_operand.vmem [shape: f32[2,4,256], index: 0, kind: input, shape index: {}]
  %s1 = inlined_call_operand.vmem [shape: bf16[6,4], index: 1, kind: input, shape index: {}]
  %s2 = inlined_call_operand.vmem [shape: f32[6,1], index: 2, kind: input, shape index: {}]
  %s3 = inlined_call_operand.vmem [shape: bf16[2,6,256], index: 3, kind: output, shape index: {}]
  %s4 = sld [smem:[#allocation0]]
  $region45: #{mixed_channel_width_forward.1} parent=0
    _
  %s6 = ssub.s32 1, %s4
  %s7 = scalar_select 0, %s6, %s4
  loop: start=0, step=1, limit=4
  $region2: #{mixed_channel_width_forward.1} parent=0 // loop_pre_header
    _
  $region3: #{mixed_channel_width_forward.1} parent=0 // loop_header
    %s9 = sphi 0, %s13
    %p10 = scmp.ge.s32.totalorder %s9, 4
    %s16 = sphi 0, %s28
    %s17 = sphi 0, %s24
    %s18 = sphi 0, %s16
    %s19 = sphi 0, %s17
    %s20 = sphi 0, %s18
    %s21 = sphi 0, %s19
    %s33 = sphi 0, %s35
    %s36 = sphi 0, %s33
    %s37 = sphi 0, %s36
    %s53 = sphi 0, %s37
    %s57 = sphi 0, %s57
    %s59 = sphi 0, %s57
    %s60 = sphi 0, %s59
    %s74 = sphi 0, %s60
    %s78 = sphi 0, %s78
    %s80 = sphi 0, %s78
    %s81 = sphi 0, %s80
    %s95 = sphi 0, %s81
    %s103 = sphi 0, %s105
    %s106 = sphi 0, %s103
    %s107 = sphi 0, %s106
    %s123 = sphi 0, %s107
  $region4: #{mixed_channel_width_forward.1} parent=0 // loop_header_branch
    %12 = sbr.rel (%p10) target = $region8
  $region5: #{mixed_channel_width_forward.1} parent=0 // loop_body
    %s14 = ssub.s32 %s9, 1
    %s15 = ssub.s32 %s9, 2
    %s22 = sadd.s32 1, %s17
    %p23 = scmp.ge.s32.totalorder %s22, 1
    %s24 = scalar_select %p23, 0, %s22
    %s25 = sadd.s32 1, %s16
    %s26 = scalar_select %p23, %s25, %s16
    %p27 = scmp.ge.s32.totalorder %s26, 2
    %s28 = scalar_select %p27, 0, %s26
    %s29 = ssub.s32 %s16, %s28
    %s30 = ssub.s32 %s17, %s24
    %s31 = sor.u32 %s29, %s30
    %p32 = scmp.eq.s32.totalorder %s31, 0
    %s34 = sadd.s32 %s33, 1
    %s35 = scalar_select %p32, %s33, %s34
    %p38 = pneg %p32
    %p39 = scmp.eq.s32.totalorder %s9, 1
    %p40 = por %p38, %p39
    %p41 = scmp.ne.s32.totalorder %s33, %s36
    %p42 = scmp.eq.s32.totalorder %s9, 0
    %p43 = por %p41, %p42
    %p44 = scmp.ne.s32.totalorder %s33, %s36
    %p45 = scmp.eq.s32.totalorder %s14, 1
    %p46 = por %p44, %p45
    %p47 = scmp.ne.s32.totalorder %s36, %s37
    %p48 = scmp.eq.s32.totalorder %s14, 0
    %p49 = por %p47, %p48
    %p50 = scmp.ne.s32.totalorder %s36, %s37
    %p51 = scmp.eq.s32.totalorder %s15, 1
    %p52 = por %p50, %p51
    %p54 = scmp.ne.s32.totalorder %s37, %s53
    %p55 = scmp.eq.s32.totalorder %s15, 0
    %p56 = por %p54, %p55
    %s58 = sadd.s32 %s57, 1
    %p61 = scmp.eq.s32.totalorder %s9, 1
    %p62 = scmp.ne.s32.totalorder %s57, %s59
    %p63 = scmp.eq.s32.totalorder %s9, 0
    %p64 = por %p62, %p63
    %p65 = scmp.ne.s32.totalorder %s57, %s59
    %p66 = scmp.eq.s32.totalorder %s14, 1
    %p67 = por %p65, %p66
    %p68 = scmp.ne.s32.totalorder %s59, %s60
    %p69 = scmp.eq.s32.totalorder %s14, 0
    %p70 = por %p68, %p69
    %p71 = scmp.ne.s32.totalorder %s59, %s60
    %p72 = scmp.eq.s32.totalorder %s15, 1
    %p73 = por %p71, %p72
    %p75 = scmp.ne.s32.totalorder %s60, %s74
    %p76 = scmp.eq.s32.totalorder %s15, 0
    %p77 = por %p75, %p76
    %s79 = sadd.s32 %s78, 1
    %p82 = scmp.eq.s32.totalorder %s9, 1
    %p83 = scmp.ne.s32.totalorder %s78, %s80
    %p84 = scmp.eq.s32.totalorder %s9, 0
    %p85 = por %p83, %p84
    %p86 = scmp.ne.s32.totalorder %s78, %s80
    %p87 = scmp.eq.s32.totalorder %s14, 1
    %p88 = por %p86, %p87
    %p89 = scmp.ne.s32.totalorder %s80, %s81
    %p90 = scmp.eq.s32.totalorder %s14, 0
    %p91 = por %p89, %p90
    %p92 = scmp.ne.s32.totalorder %s80, %s81
    %p93 = scmp.eq.s32.totalorder %s15, 1
    %p94 = por %p92, %p93
    %p96 = scmp.ne.s32.totalorder %s81, %s95
    %p97 = scmp.eq.s32.totalorder %s15, 0
    %p98 = por %p96, %p97
    %s99 = ssub.s32 %s16, %s28
    %s100 = ssub.s32 %s17, %s24
    %s101 = sor.u32 %s99, %s100
    %p102 = scmp.eq.s32.totalorder %s101, 0
    %s104 = sadd.s32 %s103, 1
    %s105 = scalar_select %p102, %s103, %s104
    %p108 = pneg %p102
    %p109 = scmp.eq.s32.totalorder %s9, 1
    %p110 = por %p108, %p109
    %p111 = scmp.ne.s32.totalorder %s103, %s106
    %p112 = scmp.eq.s32.totalorder %s9, 0
    %p113 = por %p111, %p112
    %p114 = scmp.ne.s32.totalorder %s103, %s106
    %p115 = scmp.eq.s32.totalorder %s14, 1
    %p116 = por %p114, %p115
    %p117 = scmp.ne.s32.totalorder %s106, %s107
    %p118 = scmp.eq.s32.totalorder %s14, 0
    %p119 = por %p117, %p118
    %p120 = scmp.ne.s32.totalorder %s106, %s107
    %p121 = scmp.eq.s32.totalorder %s15, 1
    %p122 = por %p120, %p121
    %p124 = scmp.ne.s32.totalorder %s107, %s123
    %p125 = scmp.eq.s32.totalorder %s15, 0
    %p126 = por %p124, %p125
    %p127 = scmp.le.s32.totalorder 1, %s9
    %p128 = scmp.lt.s32.totalorder %s9, 3
    %p129 = pnand %p127, %p128
    %p130 = pneg %p129
    // Predicated region
    $region9: #{mixed_channel_width_forward.1} parent=5 // pred_check
      _
    $region10: #{mixed_channel_width_forward.1} parent=5 // pred_check_branch
      %132 = sbr.rel (%p129) target = $region12
    $region11: #{mixed_channel_width_forward.1} parent=5 // pred_region
      %s133 = ssub.s32 %s9, 1
      // Predicated region
      $region13: #{mixed_channel_width_forward.1} parent=11 // pred_check
        %p134 = pneg %p70
      $region14: #{mixed_channel_width_forward.1} parent=11 // pred_check_branch
        %136 = sbr.rel (%p134) target = $region16
      $region15: #{mixed_channel_width_forward.1} parent=11 // pred_region
        _
      $region16: #{mixed_channel_width_forward.1} parent=11 // pred_fallthru
        _
      // Predicated region
      $region17: #{mixed_channel_width_forward.1} parent=11 // pred_check
        %p137 = pneg %p91
      $region18: #{mixed_channel_width_forward.1} parent=11 // pred_check_branch
        %139 = sbr.rel (%p137) target = $region20
      $region19: #{mixed_channel_width_forward.1} parent=11 // pred_region
        _
      $region20: #{mixed_channel_width_forward.1} parent=11 // pred_fallthru
        _
    $region12: #{mixed_channel_width_forward.1} parent=5 // pred_fallthru
      _
    %p140 = scmp.lt.s32.totalorder %s9, 2
    // Predicated region
    $region21: #{mixed_channel_width_forward.1} parent=5 // pred_check
      %p141 = pneg %p140
    $region22: #{mixed_channel_width_forward.1} parent=5 // pred_check_branch
      %143 = sbr.rel (%p141) target = $region24
    $region23: #{mixed_channel_width_forward.1} parent=5 // pred_region
      // Predicated region
      $region25: #{mixed_channel_width_forward.1} parent=23 // pred_check
        %p144 = pneg %p43
      $region26: #{mixed_channel_width_forward.1} parent=23 // pred_check_branch
        %146 = sbr.rel (%p144) target = $region28
      $region27: #{mixed_channel_width_forward.1} parent=23 // pred_region
        %s147 = smul.u32 2, %s17
        %p148 = scmp.lt.s32.totalorder %s16, 1
        %s149 = scalar_select %p148, %s16, 1
        %p150 = scmp.lt.s32.totalorder %s147, 1
        %s151 = scalar_select %p150, %s147, 1
        %s152 = smul.addr %s149, 2
        %s153 = sadd.s32 %s151, %s152
        %s154 = smul.addr %s153, 4
        %s155 = scalar_lea.vmem %s0, %s154
        %s156 = smul.u32 2, %s17
      $region28: #{mixed_channel_width_forward.1} parent=23 // pred_fallthru
        _
    $region24: #{mixed_channel_width_forward.1} parent=5 // pred_fallthru
      _
    %p157 = scmp.le.s32.totalorder 1, %s9
    %p158 = scmp.lt.s32.totalorder %s9, 3
    %p159 = pnand %p157, %p158
    %p160 = pneg %p159
    // Predicated region
    $region29: #{mixed_channel_width_forward.1} parent=5 // pred_check
      _
    $region30: #{mixed_channel_width_forward.1} parent=5 // pred_check_branch
      %162 = sbr.rel (%p159) target = $region32
    $region31: #{mixed_channel_width_forward.1} parent=5 // pred_region
      %s163 = ssub.s32 %s9, 1
      %s164 = smul.u32 2, %s19
      %p165 = scmp.lt.s32.totalorder %s18, 1
      %s166 = scalar_select %p165, %s18, 1
      %p167 = scmp.lt.s32.totalorder %s164, 1
      %s168 = scalar_select %p167, %s164, 1
      %s169 = smul.addr %s166, 2
      %s170 = sadd.s32 %s168, %s169
      %s171 = smul.addr %s170, 4
      %s172 = scalar_lea.vmem %s0, %s171
      %p173 = pneg %p49
      %p174 = pneg %p46
      %p175 = pneg %p70
      %p176 = pneg %p67
      %p177 = pneg %p91
      %p178 = pneg %p88
      %p179 = pneg %p119
      %p180 = pneg %p116
      %s181 = smul.u32 2, %s19
      %p182 = scmp.lt.s32.totalorder %s18, 1
      %s183 = scalar_select %p182, %s18, 1
      %p184 = scmp.lt.s32.totalorder %s181, 1
      %s185 = scalar_select %p184, %s181, 1
      %s186 = smul.addr %s183, 2
      %s187 = sadd.s32 %s185, %s186
      %s188 = smul.addr %s187, 4
      %s189 = scalar_lea.vmem %s3, %s188
      %s190 = smul.u32 2, %s19
      %p191 = scmp.lt.s32.totalorder %s18, 1
      %s192 = scalar_select %p191, %s18, 1
      %p193 = scmp.lt.s32.totalorder %s190, 1
      %s194 = scalar_select %p193, %s190, 1
      %s195 = smul.addr %s192, 2
      %s196 = sadd.s32 %s194, %s195
      %s197 = smul.addr %s196, 4
      %s198 = scalar_lea.vmem %s0, %s197
      %s199 = smul.u32 2, %s19
      %s200 = smul.u32 2, %s19
      %p201 = scmp.lt.s32.totalorder %s18, 1
      %s202 = scalar_select %p201, %s18, 1
      %p203 = scmp.lt.s32.totalorder %s200, 1
      %s204 = scalar_select %p203, %s200, 1
      %s205 = smul.addr %s202, 2
      %s206 = sadd.s32 %s204, %s205
      %s207 = smul.addr %s206, 4
      %s208 = scalar_lea.vmem %s3, %s207
      %s209 = smul.u32 2, %s19
      %v211 = vld [vmem:[%s198] sm:$0xff]
      %v213 = vcombine.high %v211, %v211
      %v215 = vpack.c.bf16 %v211, %v211
      %v216 = vpack.c.bf16 %v213, %v213
      %v217 = vld [vmem:[%s1] sm:$0x7]
      %v218 = vld [vmem:[%s2] sm:$0x3f]
      %220 = vset.pattern.permute.xlu0 0
      %221 = vperm.xlu0 %220, %v218
      %v222 = vpop.permute.xlu0 %221
      %vm224 = vcmask 31744
      %v226 = vsel %vm224, %v217, 0
      %vm228 = vcmask 1041408
      %v230 = vsel %vm228, %v215, 0
      %v233 = vsel %vm228, %v216, 0
      %235 = vmatprep.subr.bf16.mxu0 0
      %236 = vmatpush1.bf16.msra.mxu0 0
      %237 = vmatprep.subr.bf16.mxu0 0
      %238 = vmatpush1.bf16.msra.mxu0 0
      %239 = vmatprep.subr.bf16.mxu0 0
      %240 = vmatpush1.bf16.msra.mxu0 0
      %241 = vmatprep.subr.bf16.mxu0 0
      %242 = vmatpush1.bf16.msra.mxu0 0
      %243 = vmatprep.subr.bf16.mxu0 0
      %244 = vmatpush1.bf16.msra.mxu0 0
      %245 = vmatprep.subr.bf16.mxu0 0
      %246 = vmatpush1.bf16.msra.mxu0 0
      %247 = vmatprep.subr.bf16.mxu0 0
      %248 = vmatpush1.bf16.msra.mxu0 0
      %249 = vmatprep.subr.bf16.mxu0 %v233
      %250 = vmatpush1.bf16.msra.mxu0 %v230
      %251 = vmatprep.subr.bf16.mxu0 0
      %252 = vmatpush2.bf16.msra.mxu0 0
      %253 = vmatprep.subr.bf16.mxu0 0
      %254 = vmatpush2.bf16.msra.mxu0 0
      %255 = vmatprep.subr.bf16.mxu0 0
      %256 = vmatpush2.bf16.msra.mxu0 0
      %257 = vmatprep.subr.bf16.mxu0 0
      %258 = vmatpush2.bf16.msra.mxu0 0
      %259 = vmatprep.subr.bf16.mxu0 0
      %260 = vmatpush2.bf16.msra.mxu0 0
      %261 = vmatprep.subr.bf16.mxu0 0
      %262 = vmatpush2.bf16.msra.mxu0 0
      %263 = vmatprep.subr.bf16.mxu0 0
      %264 = vmatpush2.bf16.msra.mxu0 0
      %265 = vmatprep.subr.bf16.mxu0 0
      %266 = vmatpush2.bf16.msra.mxu0 0
      %267 = vmatprep.mubr.bf16.mxu0 0
      %268 = vmatmul.mubr.bf16.gmra.mxu0 %v226
      %v269 = vpop.f32.mrf.mxu0
      %v270 = vadd.f32 %v222, %v269
      %v271 = vpop.f32.mrf.mxu0
      %v272 = vadd.f32 %v222, %v271
      %v273 = vpop.f32.mrf.mxu0
      %v274 = vpop.f32.mrf.mxu0
      %275 = vdwg.mxu0
      %v276 = vpack.c.bf16 %v270, %v270
      %v277 = vpack.c.bf16 %v272, %v272
      %v280 = vunpack.c.l.b16 %v276
      %v281 = vunpack.c.l.b16 %v277
      %v282 = vpack.c.b16 %v281, %v280
      %284 = vst [vmem:[%s208] sm:$0x77] %v282
      %s285 = smul.u32 2, %s19
      %p286 = scmp.lt.s32.totalorder %s18, 1
      %s287 = scalar_select %p286, %s18, 1
      %p288 = scmp.lt.s32.totalorder %s285, 1
      %s289 = scalar_select %p288, %s285, 1
      %s290 = smul.addr %s287, 2
      %s291 = sadd.s32 %s289, %s290
      %s292 = smul.addr %s291, 4
      %s293 = scalar_lea.vmem %s3, %s292
      // Predicated region
      $region33: #{mixed_channel_width_forward.1} parent=31 // pred_check
        %p294 = pneg %p116
      $region34: #{mixed_channel_width_forward.1} parent=31 // pred_check_branch
        %296 = sbr.rel (%p294) target = $region36
      $region35: #{mixed_channel_width_forward.1} parent=31 // pred_region
        %s297 = smul.u32 2, %s19
      $region36: #{mixed_channel_width_forward.1} parent=31 // pred_fallthru
        _
    $region32: #{mixed_channel_width_forward.1} parent=5 // pred_fallthru
      _
    %p298 = scmp.le.s32.totalorder 2, %s9
    // Predicated region
    $region37: #{mixed_channel_width_forward.1} parent=5 // pred_check
      %p299 = pneg %p298
    $region38: #{mixed_channel_width_forward.1} parent=5 // pred_check_branch
      %301 = sbr.rel (%p299) target = $region40
    $region39: #{mixed_channel_width_forward.1} parent=5 // pred_region
      %s302 = ssub.s32 %s9, 2
      // Predicated region
      $region41: #{mixed_channel_width_forward.1} parent=39 // pred_check
        %p303 = pneg %p122
      $region42: #{mixed_channel_width_forward.1} parent=39 // pred_check_branch
        %305 = sbr.rel (%p303) target = $region44
      $region43: #{mixed_channel_width_forward.1} parent=39 // pred_region
        %s306 = smul.u32 2, %s21
        %p307 = scmp.lt.s32.totalorder %s20, 1
        %s308 = scalar_select %p307, %s20, 1
        %p309 = scmp.lt.s32.totalorder %s306, 1
        %s310 = scalar_select %p309, %s306, 1
        %s311 = smul.addr %s308, 2
        %s312 = sadd.s32 %s310, %s311
        %s313 = smul.addr %s312, 4
        %s314 = scalar_lea.vmem %s3, %s313
      $region44: #{mixed_channel_width_forward.1} parent=39 // pred_fallthru
        _
    $region40: #{mixed_channel_width_forward.1} parent=5 // pred_fallthru
      _
  $region6: #{mixed_channel_width_forward.1} parent=0 // loop_footer
    %s13 = sadd.s32 1, %s9
  $region7: #{mixed_channel_width_forward.1} parent=0 // loop_footer_branch
    %8 = sbr.rel target = $region3
  $region8: #{mixed_channel_width_forward.1} parent=0 // loop_exit
    _

</llo_original>
